<compile_context>
chip_gen: v7x
topology: tpu7x:2x2x1
jax: 0.10.0
libtpu: 0.0.40
codegen_flags: <defaults>
</compile_context>

<pallas_src>
import functools

import numpy as np

import jax
import jax.numpy as jnp
from jax.experimental import pallas as pl
from jax.experimental.pallas import tpu as pltpu


def _round_up(x, m):
    return ((x + m - 1) // m) * m


def _vmem_budget_bytes():
    """Per-TensorCore VMEM budget: capacity minus headroom for Mosaic scratch."""
    try:
        cap = int(pltpu.get_tpu_info().vmem_capacity_bytes)
    except Exception:
        cap = 64 * 1024 * 1024        # conservative fallback (v7x-sized)
    return max(cap - 16 * 1024 * 1024, 32 * 1024 * 1024)


def _const_spec(shape):
    """Constant operand: same block every grid step -> single-buffer it."""
    return pl.BlockSpec(shape, lambda *_: (0, 0), pipeline_mode=pl.Buffered(1))


def _ln_fc1(x_ref, mask_ref, gamma_ref, beta_ref, w1_ref, b1_ref, *,
            eps, true_in_dim, needs_mask):
    """LayerNorm (f32 statistics) + fc1 + ReLU for one row tile -> f32 (tile, hid_pad)."""
    x = x_ref[...].astype(jnp.float32)
    if needs_mask:
        # Padded feature columns of x are zero, so the sum only needs rescaling
        # by the true width; the precomputed mask zeroes (x - mean) in padding so
        # the variance stays unbiased (two-pass form avoids cancellation issues).
        inv_d = 1.0 / float(true_in_dim)
        mean = jnp.sum(x, axis=-1, keepdims=True) * inv_d
        centered = (x - mean) * mask_ref[...]
        var = jnp.sum(centered * centered, axis=-1, keepdims=True) * inv_d
    else:
        mean = jnp.mean(x, axis=-1, keepdims=True)
        centered = x - mean
        var = jnp.mean(centered * centered, axis=-1, keepdims=True)
    xn = centered * jax.lax.rsqrt(var + eps)
    xn = xn * gamma_ref[...] + beta_ref[...]
    h = jnp.dot(xn.astype(w1_ref.dtype), w1_ref[...],
                preferred_element_type=jnp.float32)
    return jnp.maximum(h + b1_ref[...], 0.0)


def _mlp_fused_kernel(x_ref, mask_ref, gamma_ref, beta_ref, w1_ref, b1_ref,
                      w2_ref, b2_ref, o_ref, *, eps, true_in_dim, needs_mask):
    h = _ln_fc1(x_ref, mask_ref, gamma_ref, beta_ref, w1_ref, b1_ref,
                eps=eps, true_in_dim=true_in_dim, needs_mask=needs_mask)
    y = jnp.dot(h.astype(w2_ref.dtype), w2_ref[...],
                preferred_element_type=jnp.float32)
    o_ref[...] = (y + b2_ref[...]).astype(o_ref.dtype)
    # TODO(synk): on v5e, emit the fc2 result in ~512-wide column chunks
    # (fori_loop) if a bundle dump shows the single vst slot saturating.


def _mlp_colsplit_kernel(x_ref, mask_ref, gamma_ref, beta_ref, w1_ref, b1_ref,
                         w2_ref, b2_ref, o_ref, h_ref, *,
                         eps, true_in_dim, needs_mask):
    """Column-slab path: LN+fc1 once per row tile (j==0), fc2 per hid-column slab."""
    @pl.when(pl.program_id(1) == 0)
    def _():
        h = _ln_fc1(x_ref, mask_ref, gamma_ref, beta_ref, w1_ref, b1_ref,
                    eps=eps, true_in_dim=true_in_dim, needs_mask=needs_mask)
        h_ref[...] = h.astype(h_ref.dtype)

    y = jnp.dot(h_ref[...], w2_ref[...], preferred_element_type=jnp.float32)
    o_ref[...] = (y + b2_ref[...]).astype(o_ref.dtype)


def mlp_block(x, params, *, eps=1e-6, tile_rows=512, matmul_dtype=None,
              force_col_split=False, col_tile=None):
    """x: (batch, seq, in_dim) -> (batch, seq, hid_dim). Eval-mode MLP_block."""
    gamma, beta, w1, b1, w2, b2 = (
        params["gamma"], params["beta"], params["w1"], params["b1"],
        params["w2"], params["b2"])
    B, S, in_dim = x.shape
    hid_dim = w1.shape[1]
    N = B * S
    out_dtype = x.dtype

    in_pad = _round_up(in_dim, 128)
    hid_pad = _round_up(hid_dim, 128)
    needs_in_pad = in_pad != in_dim
    needs_hid_pad = hid_pad != hid_dim

    # Row tile: dtype-aware sublane alignment; once N is large enough, force
    # >= 2 row-grid steps so the "parallel" axis feeds both v7x TensorCores.
    row_align = max(8, 32 // x.dtype.itemsize)
    tile = min(int(tile_rows), _round_up(N, row_align))
    if N >= 256:
        tile = min(tile, _round_up(pl.cdiv(N, 2), row_align))
    tile = max(_round_up(tile, row_align), row_align)

    # Weights / constants: feature dims lane-padded; weights optionally pre-cast
    # once to the MXU-native matmul dtype (e.g. bf16); LN params / biases in f32.
    w_dtype = np.dtype(w1.dtype if matmul_dtype is None else matmul_dtype)

    def pad2(a, r, c):
        return a if (r == 0 and c == 0) else jnp.pad(a, ((0, r), (0, c)))

    def pad1(a, c):
        return a if c == 0 else jnp.pad(a, (0, c))

    w1p = pad2(w1, in_pad - in_dim, hid_pad - hid_dim).astype(w_dtype)
    w2p = pad2(w2, hid_pad - hid_dim, hid_pad - hid_dim).astype(w_dtype)
    gamma2d = pad1(gamma.astype(jnp.float32), in_pad - in_dim).reshape(1, in_pad)
    beta2d = pad1(beta.astype(jnp.float32), in_pad - in_dim).reshape(1, in_pad)
    b1_2d = pad1(b1.astype(jnp.float32), hid_pad - hid_dim).reshape(1, hid_pad)
    b2_2d = pad1(b2.astype(jnp.float32), hid_pad - hid_dim).reshape(1, hid_pad)
    mask2d = (jnp.arange(in_pad) < in_dim).astype(jnp.float32).reshape(1, in_pad)

    # No-pad fast path for the activation: feature pad only when needed, rows never
    # (the ragged last row tile is handled by Pallas block clipping).
    x2d = x.reshape(N, in_dim)
    if needs_in_pad:
        x2d = jnp.pad(x2d, ((0, 0), (0, in_pad - in_dim)))

    x_item = x2d.dtype.itemsize
    w_item = w_dtype.itemsize
    out_item = np.dtype(out_dtype).itemsize
    budget = _vmem_budget_bytes()
    margin = 2 * 1024 * 1024

    def fused_footprint(t):
        return ((w1p.size + w2p.size) * w_item           # Buffered(1) weights
                + (3 * in_pad + 2 * hid_pad) * 4          # mask/gamma/beta/b1/b2
                + 2 * t * in_pad * x_item                 # double-buffered x tile
                + 2 * t * hid_pad * out_item              # double-buffered out tile
                + 2 * t * in_pad * 4                      # LN intermediates (f32)
                + 2 * t * hid_pad * 4                     # h / y intermediates (f32)
                + margin)

    def col_footprint(t, ct):
        return (w1p.size * w_item                         # Buffered(1) W1
                + 2 * hid_pad * ct * w_item               # double-buffered W2 slab
                + (3 * in_pad + 3 * hid_pad) * 4
                + 2 * t * in_pad * x_item
                + 2 * t * ct * out_item
                + t * hid_pad * w_item                    # h scratch
                + 2 * t * in_pad * 4 + t * hid_pad * 4 + t * ct * 4
                + margin)

    tile_fused = tile
    while fused_footprint(tile_fused) > budget and tile_fused > row_align:
        tile_fused = max(_round_up(tile_fused // 2, row_align), row_align)
    use_col = bool(force_col_split) or fused_footprint(tile_fused) > budget

    kern_kw = dict(eps=float(eps), true_in_dim=in_dim, needs_mask=needs_in_pad)
    flops = 2 * N * hid_pad * (in_pad + hid_pad) + 10 * N * in_pad
    bytes_accessed = (x2d.size * x_item + (w1p.size + w2p.size) * w_item
                      + N * hid_pad * out_item)
    cost = pl.CostEstimate(flops=int(flops), transcendentals=int(N),
                           bytes_accessed=int(bytes_accessed))
    args = (x2d, mask2d, gamma2d, beta2d, w1p, b1_2d, w2p, b2_2d)

    if not use_col:
        tile = tile_fused
        vmem_limit = int(min(max(fused_footprint(tile), 32 * 1024 * 1024), budget))
        out2d = pl.pallas_call(
            functools.partial(_mlp_fused_kernel, **kern_kw),
            out_shape=jax.ShapeDtypeStruct((N, hid_pad), out_dtype),
            grid_spec=pltpu.PrefetchScalarGridSpec(
                num_scalar_prefetch=0,
                grid=(pl.cdiv(N, tile),),
                in_specs=[
                    pl.BlockSpec((tile, in_pad), lambda i: (i, 0)),   # x rows
                    _const_spec((1, in_pad)),                         # mask
                    _const_spec((1, in_pad)),                         # gamma
                    _const_spec((1, in_pad)),                         # beta
                    _const_spec((in_pad, hid_pad)),                   # W1
                    _const_spec((1, hid_pad)),                        # b1
                    _const_spec((hid_pad, hid_pad)),                  # W2
                    _const_spec((1, hid_pad)),                        # b2
                ],
                out_specs=pl.BlockSpec((tile, hid_pad), lambda i: (i, 0)),
            ),
            compiler_params=pltpu.CompilerParams(
                dimension_semantics=("parallel",),
                vmem_limit_bytes=vmem_limit),
            cost_estimate=cost,
        )(*args)
    else:
        if col_tile is None:
            ct = 128
            for cand in (512, 256, 128):
                if hid_pad % cand == 0:
                    ct = cand
                    break
        else:
            ct = int(col_tile)
            assert ct % 128 == 0 and hid_pad % ct == 0, "col_tile must divide hid_pad"
        while col_footprint(tile, ct) > budget and tile > row_align:
            tile = max(_round_up(tile // 2, row_align), row_align)
        while col_footprint(tile, ct) > budget and ct > 128:
            ct //= 2
        # TODO(synk): if even (tile=row_align, ct=128) overflows the budget, also
        # split fc1 along a K grid axis with a pl.when-guarded f32 accumulator.
        vmem_limit = int(min(max(col_footprint(tile, ct), 32 * 1024 * 1024), budget))
        out2d = pl.pallas_call(
            functools.partial(_mlp_colsplit_kernel, **kern_kw),
            out_shape=jax.ShapeDtypeStruct((N, hid_pad), out_dtype),
            grid_spec=pltpu.PrefetchScalarGridSpec(
                num_scalar_prefetch=0,
                grid=(pl.cdiv(N, tile), hid_pad // ct),
                in_specs=[
                    pl.BlockSpec((tile, in_pad), lambda i, j: (i, 0)),   # x rows
                    _const_spec((1, in_pad)),                            # mask
                    _const_spec((1, in_pad)),                            # gamma
                    _const_spec((1, in_pad)),                            # beta
                    _const_spec((in_pad, hid_pad)),                      # W1 (resident)
                    _const_spec((1, hid_pad)),                           # b1
                    pl.BlockSpec((hid_pad, ct), lambda i, j: (0, j)),    # W2 slab
                    pl.BlockSpec((1, ct), lambda i, j: (0, j)),          # b2 slab
                ],
                out_specs=pl.BlockSpec((tile, ct), lambda i, j: (i, j)),
                scratch_shapes=[pltpu.VMEM((tile, hid_pad), w_dtype)],
            ),
            compiler_params=pltpu.CompilerParams(
                dimension_semantics=("parallel", "arbitrary"),
                vmem_limit_bytes=vmem_limit),
            cost_estimate=cost,
        )(*args)

    if needs_hid_pad:
        out2d = out2d[:, :hid_dim]
    return out2d.reshape(B, S, hid_dim)


def make_params(key, in_dim, hid_dim, dtype=jnp.float32):
    """Synthetic parameters matching nn.LayerNorm/nn.Linear shapes.

    nn.Linear stores weight as (out, in); we keep (in, out) so the kernel does x @ W
    (identical math). Scales are O(1) so structural bugs show up in the checks.
    """
    k1, k2, k3, k4, k5, k6 = jax.random.split(key, 6)
    w1 = jax.random.normal(k1, (in_dim, hid_dim), dtype) * (1.0 / jnp.sqrt(in_dim))
    b1 = jax.random.normal(k2, (hid_dim,), dtype) * 0.5
    w2 = jax.random.normal(k3, (hid_dim, hid_dim), dtype) * (1.0 / jnp.sqrt(hid_dim))
    b2 = jax.random.normal(k4, (hid_dim,), dtype) * 0.5
    gamma = 1.0 + 0.5 * jax.random.normal(k5, (in_dim,), dtype)
    beta = 0.5 * jax.random.normal(k6, (in_dim,), dtype)
    return {"gamma": gamma, "beta": beta, "w1": w1, "b1": b1, "w2": w2, "b2": b2}


def mlp_block_ref(x, params, eps=1e-6):
    """Pure-JAX reference (high-precision matmuls) for correctness checking."""
    hp = jax.lax.Precision.HIGHEST
    mean = jnp.mean(x, axis=-1, keepdims=True)
    var = jnp.mean((x - mean) ** 2, axis=-1, keepdims=True)
    xn = (x - mean) / jnp.sqrt(var + eps) * params["gamma"] + params["beta"]
    h = jnp.maximum(jnp.dot(xn, params["w1"], precision=hp) + params["b1"], 0.0)
    return jnp.dot(h, params["w2"], precision=hp) + params["b2"]


if __name__ == "__main__":
    key = jax.random.PRNGKey(0)
    k = jax.random.split(key, 6)

    # 1) Spec-like small shapes (padded feature dims), fused single-axis path.
    B, S, in_dim, hid_dim = 2, 8, 32, 64
    x1 = jax.random.normal(k[0], (B, S, in_dim), jnp.float32)
    p1 = make_params(k[1], in_dim, hid_dim)
    o1 = jax.block_until_ready(mlp_block(x1, p1))
    r1 = mlp_block_ref(x1, p1)
    assert o1.shape == (B, S, hid_dim)
    assert jnp.allclose(o1, r1, atol=2e-2, rtol=2e-2), float(jnp.max(jnp.abs(o1 - r1)))

    # 2) Ragged last row tile + masked-LN feature padding + output column slice.
    B2, S2, in2, hid2 = 2, 50, 48, 80          # N=100, tile=64 -> 2 steps, last ragged
    x2 = jax.random.normal(k[2], (B2, S2, in2), jnp.float32)
    p2 = make_params(k[3], in2, hid2)
    o2 = jax.block_until_ready(mlp_block(x2, p2, tile_rows=64))
    r2 = mlp_block_ref(x2, p2)
    assert o2.shape == (B2, S2, hid2)
    assert jnp.allclose(o2, r2, atol=2e-2, rtol=2e-2), float(jnp.max(jnp.abs(o2 - r2)))

    # 3) Lane-aligned no-pad fast path + forced column-slab path + bf16 weights.
    B3, S3, in3, hid3 = 2, 8, 128, 256
    x3 = jax.random.normal(k[4], (B3, S3, in3), jnp.float32)
    p3 = make_params(k[5], in3, hid3)
    o3 = jax.block_until_ready(
        mlp_block(x3, p3, matmul_dtype=jnp.bfloat16,
                  force_col_split=True, col_tile=128))
    r3 = mlp_block_ref(x3, p3)
    assert o3.shape == (B3, S3, hid3)
    assert jnp.allclose(o3, r3, atol=6e-2, rtol=6e-2), float(jnp.max(jnp.abs(o3 - r3)))

    print("KERNEL_OK")
</pallas_src>

<mosaic_0001>
module attributes {stable_mosaic.version = 11 : i64} {
  func.func @_mlp_fused_kernel(%arg0: i32, %arg1: memref<16x128xf32, #tpu.memory_space<vmem>>, %arg2: memref<1x128xf32, #tpu.memory_space<vmem>>, %arg3: memref<1x128xf32, #tpu.memory_space<vmem>>, %arg4: memref<1x128xf32, #tpu.memory_space<vmem>>, %arg5: memref<128x128xf32, #tpu.memory_space<vmem>>, %arg6: memref<1x128xf32, #tpu.memory_space<vmem>>, %arg7: memref<128x128xf32, #tpu.memory_space<vmem>>, %arg8: memref<1x128xf32, #tpu.memory_space<vmem>>, %arg9: memref<16x128xf32, #tpu.memory_space<vmem>>) attributes {dimension_semantics = [#tpu.dimension_semantics<parallel>], iteration_bounds = array<i64: 1>, scalar_prefetch = 0 : i64, scratch_operands = 0 : i64, tpu.core_type = #tpu.core_type<tc>, window_params = [{transform_indices = @transform_0, window_bounds = array<i64: 16, 128>}, {pipeline_mode = #tpu.pipeline_mode<synchronous>, transform_indices = @transform_1, window_bounds = array<i64: 1, 128>}, {pipeline_mode = #tpu.pipeline_mode<synchronous>, transform_indices = @transform_2, window_bounds = array<i64: 1, 128>}, {pipeline_mode = #tpu.pipeline_mode<synchronous>, transform_indices = @transform_3, window_bounds = array<i64: 1, 128>}, {pipeline_mode = #tpu.pipeline_mode<synchronous>, transform_indices = @transform_4, window_bounds = array<i64: 128, 128>}, {pipeline_mode = #tpu.pipeline_mode<synchronous>, transform_indices = @transform_5, window_bounds = array<i64: 1, 128>}, {pipeline_mode = #tpu.pipeline_mode<synchronous>, transform_indices = @transform_6, window_bounds = array<i64: 128, 128>}, {pipeline_mode = #tpu.pipeline_mode<synchronous>, transform_indices = @transform_7, window_bounds = array<i64: 1, 128>}, {transform_indices = @transform_8, window_bounds = array<i64: 16, 128>}]} {
    %c0 = arith.constant 0 : index
    %c0_0 = arith.constant 0 : index
    %0 = vector.load %arg1[%c0, %c0_0] : memref<16x128xf32, #tpu.memory_space<vmem>>, vector<16x128xf32>
    %cst = arith.constant dense<0.000000e+00> : vector<16xf32>
    %1 = vector.multi_reduction <add>, %0, %cst [1] : vector<16x128xf32> to vector<16xf32>
    %2 = vector.shape_cast %1 : vector<16xf32> to vector<16x1xf32>
    %cst_1 = arith.constant 3.125000e-02 : f32
    %3 = vector.broadcast %cst_1 : f32 to vector<16x1xf32>
    %4 = arith.mulf %2, %3 : vector<16x1xf32>
    %5 = vector.broadcast %4 : vector<16x1xf32> to vector<16x128xf32>
    %6 = arith.subf %0, %5 : vector<16x128xf32>
    %c0_2 = arith.constant 0 : index
    %c0_3 = arith.constant 0 : index
    %7 = vector.load %arg2[%c0_2, %c0_3] : memref<1x128xf32, #tpu.memory_space<vmem>>, vector<1x128xf32>
    %8 = vector.broadcast %7 : vector<1x128xf32> to vector<16x128xf32>
    %9 = arith.mulf %6, %8 : vector<16x128xf32>
    %10 = arith.mulf %9, %9 : vector<16x128xf32>
    %cst_4 = arith.constant dense<0.000000e+00> : vector<16xf32>
    %11 = vector.multi_reduction <add>, %10, %cst_4 [1] : vector<16x128xf32> to vector<16xf32>
    %12 = vector.shape_cast %11 : vector<16xf32> to vector<16x1xf32>
    %cst_5 = arith.constant 3.125000e-02 : f32
    %13 = vector.broadcast %cst_5 : f32 to vector<16x1xf32>
    %14 = arith.mulf %12, %13 : vector<16x1xf32>
    %cst_6 = arith.constant 9.99999997E-7 : f32
    %15 = vector.broadcast %cst_6 : f32 to vector<16x1xf32>
    %16 = arith.addf %14, %15 : vector<16x1xf32>
    %17 = math.rsqrt %16 : vector<16x1xf32>
    %18 = vector.broadcast %17 : vector<16x1xf32> to vector<16x128xf32>
    %19 = arith.mulf %9, %18 : vector<16x128xf32>
    %c0_7 = arith.constant 0 : index
    %c0_8 = arith.constant 0 : index
    %20 = vector.load %arg3[%c0_7, %c0_8] : memref<1x128xf32, #tpu.memory_space<vmem>>, vector<1x128xf32>
    %21 = vector.broadcast %20 : vector<1x128xf32> to vector<16x128xf32>
    %22 = arith.mulf %19, %21 : vector<16x128xf32>
    %c0_9 = arith.constant 0 : index
    %c0_10 = arith.constant 0 : index
    %23 = vector.load %arg4[%c0_9, %c0_10] : memref<1x128xf32, #tpu.memory_space<vmem>>, vector<1x128xf32>
    %24 = vector.broadcast %23 : vector<1x128xf32> to vector<16x128xf32>
    %25 = arith.addf %22, %24 : vector<16x128xf32>
    %c0_11 = arith.constant 0 : index
    %c0_12 = arith.constant 0 : index
    %26 = vector.load %arg5[%c0_11, %c0_12] : memref<128x128xf32, #tpu.memory_space<vmem>>, vector<128x128xf32>
    %cst_13 = arith.constant dense<0.000000e+00> : vector<16x128xf32>
    %27 = tpu.matmul %25, %26, %cst_13 {dimension_numbers = #tpu.dot_dimension_numbers<[1], [0], [0], [1], [0, 0, 1, 1], [], []>} : vector<16x128xf32>, vector<128x128xf32>, vector<16x128xf32> -> vector<16x128xf32>
    %c0_14 = arith.constant 0 : index
    %c0_15 = arith.constant 0 : index
    %28 = vector.load %arg6[%c0_14, %c0_15] : memref<1x128xf32, #tpu.memory_space<vmem>>, vector<1x128xf32>
    %29 = vector.broadcast %28 : vector<1x128xf32> to vector<16x128xf32>
    %30 = arith.addf %27, %29 : vector<16x128xf32>
    %cst_16 = arith.constant 0.000000e+00 : f32
    %31 = vector.broadcast %cst_16 : f32 to vector<16x128xf32>
    %32 = arith.maximumf %30, %31 : vector<16x128xf32>
    %c0_17 = arith.constant 0 : index
    %c0_18 = arith.constant 0 : index
    %33 = vector.load %arg7[%c0_17, %c0_18] : memref<128x128xf32, #tpu.memory_space<vmem>>, vector<128x128xf32>
    %cst_19 = arith.constant dense<0.000000e+00> : vector<16x128xf32>
    %34 = tpu.matmul %32, %33, %cst_19 {dimension_numbers = #tpu.dot_dimension_numbers<[1], [0], [0], [1], [0, 0, 1, 1], [], []>} : vector<16x128xf32>, vector<128x128xf32>, vector<16x128xf32> -> vector<16x128xf32>
    %c0_20 = arith.constant 0 : index
    %c0_21 = arith.constant 0 : index
    %35 = vector.load %arg8[%c0_20, %c0_21] : memref<1x128xf32, #tpu.memory_space<vmem>>, vector<1x128xf32>
    %36 = vector.broadcast %35 : vector<1x128xf32> to vector<16x128xf32>
    %37 = arith.addf %34, %36 : vector<16x128xf32>
    %c0_22 = arith.constant 0 : index
    %c0_23 = arith.constant 0 : index
    %38 = vector.load %arg9[%c0_22, %c0_23] : memref<16x128xf32, #tpu.memory_space<vmem>>, vector<16x128xf32>
    tpu.vector_store %arg9[%c0_22, %c0_23], %37 {strides = array<i32>} : memref<16x128xf32, #tpu.memory_space<vmem>>, vector<16x128xf32>,
    return
  }
  func.func @transform_0(%arg0: i32) -> (i32, i32) {
    %c0_i32 = arith.constant 0 : i32
    %c0_i32_0 = arith.constant 0 : i32
    return %arg0, %c0_i32 : i32, i32
  }
  func.func @transform_1(%arg0: i32) -> (i32, i32) {
    %c0_i32 = arith.constant 0 : i32
    %c0_i32_0 = arith.constant 0 : i32
    %c0_i32_1 = arith.constant 0 : i32
    return %c0_i32, %c0_i32_0 : i32, i32
  }
  func.func @transform_2(%arg0: i32) -> (i32, i32) {
    %c0_i32 = arith.constant 0 : i32
    %c0_i32_0 = arith.constant 0 : i32
    %c0_i32_1 = arith.constant 0 : i32
    return %c0_i32, %c0_i32_0 : i32, i32
  }
  func.func @transform_3(%arg0: i32) -> (i32, i32) {
    %c0_i32 = arith.constant 0 : i32
    %c0_i32_0 = arith.constant 0 : i32
    %c0_i32_1 = arith.constant 0 : i32
    return %c0_i32, %c0_i32_0 : i32, i32
  }
  func.func @transform_4(%arg0: i32) -> (i32, i32) {
    %c0_i32 = arith.constant 0 : i32
    %c0_i32_0 = arith.constant 0 : i32
    %c0_i32_1 = arith.constant 0 : i32
    return %c0_i32, %c0_i32_0 : i32, i32
  }
  func.func @transform_5(%arg0: i32) -> (i32, i32) {
    %c0_i32 = arith.constant 0 : i32
    %c0_i32_0 = arith.constant 0 : i32
    %c0_i32_1 = arith.constant 0 : i32
    return %c0_i32, %c0_i32_0 : i32, i32
  }
  func.func @transform_6(%arg0: i32) -> (i32, i32) {
    %c0_i32 = arith.constant 0 : i32
    %c0_i32_0 = arith.constant 0 : i32
    %c0_i32_1 = arith.constant 0 : i32
    return %c0_i32, %c0_i32_0 : i32, i32
  }
  func.func @transform_7(%arg0: i32) -> (i32, i32) {
    %c0_i32 = arith.constant 0 : i32
    %c0_i32_0 = arith.constant 0 : i32
    %c0_i32_1 = arith.constant 0 : i32
    return %c0_i32, %c0_i32_0 : i32, i32
  }
  func.func @transform_8(%arg0: i32) -> (i32, i32) {
    %c0_i32 = arith.constant 0 : i32
    %c0_i32_0 = arith.constant 0 : i32
    return %arg0, %c0_i32 : i32, i32
  }
}

</mosaic_0001>

<llo_original>
// kernel: tpu_custom_call.1
$region0: #{tpu_custom_call.1}
  #allocation0 [shape = 'u32[]', space=smem, size = 0x4, offset = 0x4, fixed_abs, tag = 'smem constant byte address 0x4 - core index']
  #allocation1 [shape = 'u32[144,128]{1,0:T(1,128)}', space=vmem, size = 0x12000, scoped, tag = 'internal scratch']
  %s0 = inlined_call_operand.hbm [shape: f32[16,128], index: 0, kind: input, shape index: {}]
  %s1 = inlined_call_operand.vmem [shape: f32[1,128], index: 1, kind: input, shape index: {}]
  %s2 = inlined_call_operand.vmem [shape: f32[1,128], index: 2, kind: input, shape index: {}]
  %s3 = inlined_call_operand.vmem [shape: f32[1,128], index: 3, kind: input, shape index: {}]
  %s4 = inlined_call_operand.hbm [shape: f32[128,128], index: 4, kind: input, shape index: {}]
  %s5 = inlined_call_operand.vmem [shape: f32[1,128], index: 5, kind: input, shape index: {}]
  %s6 = inlined_call_operand.hbm [shape: f32[128,128], index: 6, kind: input, shape index: {}]
  %s7 = inlined_call_operand.vmem [shape: f32[1,128], index: 7, kind: input, shape index: {}]
  %s8 = inlined_call_operand.hbm [shape: f32[16,128], index: 8, kind: output, shape index: {}]
  %s9 = sld [smem:[#allocation0]]
  $region54: #{tpu_custom_call.1} parent=0
    _
  %s11 = ssub.s32 1, %s9
  %s12 = scalar_select 0, %s11, %s9
  $region1: #{tpu_custom_call.1} parent=0
    #allocation2 [shape = 'u8[8192]{0}', space=vmem, size = 0x2000, scoped, tag = 'input window, operand 0, single buffered']
    #allocation3 [shape = 's32[1]{0}', space=sflag, size = 0x4, scoped, tag = 'scoped memory for tpu_custom_call.1']
    #allocation4 [shape = 's32[1]{0}', space=sflag, size = 0x4, scoped, tag = 'scoped memory for tpu_custom_call.1']
    #allocation5 [shape = 'u8[65536]{0}', space=vmem, size = 0x10000, scoped, tag = 'input window, operand 4, single buffered']
    #allocation6 [shape = 's32[1]{0}', space=sflag, size = 0x4, scoped, tag = 'scoped memory for tpu_custom_call.1']
    #allocation7 [shape = 'u8[65536]{0}', space=vmem, size = 0x10000, scoped, tag = 'input window, operand 6, single buffered']
    #allocation8 [shape = 'u8[8192]{0}', space=vmem, size = 0x2000, scoped, tag = 'output window, operand 0, single buffered']
    %13 = vsyncpa [#allocation3], 0
    %14 = vsyncpa [#allocation6], 0
    %15 = vsyncpa [#allocation4], 0
    // Predicated region
    $region2: #{tpu_custom_call.1} parent=1 // pred_check
      _
    $region3: #{tpu_custom_call.1} parent=1 // pred_check_branch
      %17 = sbr.rel (0) target = $region5
    $region4: #{tpu_custom_call.1} parent=1 // pred_region
      %s19 = ssub.s32 256, 256
      %20 = vsyncadd [#allocation3], %s19
      %s21 = sshll.u32 [#allocation2], 4
      %s22 = int_to_ptr.vmem [resolvable:$true] %s21
      %27 = dma.hbm_to_vmem [thread:$0]  %s0, 256, %s22, [#allocation3], 128, 128, 8
    $region5: #{tpu_custom_call.1} parent=1 // pred_fallthru
      _
    // Predicated region
    $region6: #{tpu_custom_call.1} parent=1 // pred_check
      _
    $region7: #{tpu_custom_call.1} parent=1 // pred_check_branch
      %29 = sbr.rel (0) target = $region9
    $region8: #{tpu_custom_call.1} parent=1 // pred_region
      _
    $region9: #{tpu_custom_call.1} parent=1 // pred_fallthru
      _
    // Predicated region
    $region10: #{tpu_custom_call.1} parent=1 // pred_check
      _
    $region11: #{tpu_custom_call.1} parent=1 // pred_check_branch
      %31 = sbr.rel (0) target = $region13
    $region12: #{tpu_custom_call.1} parent=1 // pred_region
      _
    $region13: #{tpu_custom_call.1} parent=1 // pred_fallthru
      _
    // Predicated region
    $region14: #{tpu_custom_call.1} parent=1 // pred_check
      _
    $region15: #{tpu_custom_call.1} parent=1 // pred_check_branch
      %33 = sbr.rel (0) target = $region17
    $region16: #{tpu_custom_call.1} parent=1 // pred_region
      _
    $region17: #{tpu_custom_call.1} parent=1 // pred_fallthru
      _
    // Predicated region
    $region18: #{tpu_custom_call.1} parent=1 // pred_check
      _
    $region19: #{tpu_custom_call.1} parent=1 // pred_check_branch
      %35 = sbr.rel (0) target = $region21
    $region20: #{tpu_custom_call.1} parent=1 // pred_region
      %s37 = ssub.s32 2048, 2048
      %38 = vsyncadd [#allocation6], %s37
      %s39 = sshll.u32 [#allocation5], 4
      %s40 = int_to_ptr.vmem [resolvable:$true] %s39
      %45 = dma.hbm_to_vmem [thread:$0]  %s4, 2048, %s40, [#allocation6], 128, 128, 8
    $region21: #{tpu_custom_call.1} parent=1 // pred_fallthru
      _
    // Predicated region
    $region22: #{tpu_custom_call.1} parent=1 // pred_check
      _
    $region23: #{tpu_custom_call.1} parent=1 // pred_check_branch
      %47 = sbr.rel (0) target = $region25
    $region24: #{tpu_custom_call.1} parent=1 // pred_region
      _
    $region25: #{tpu_custom_call.1} parent=1 // pred_fallthru
      _
    // Predicated region
    $region26: #{tpu_custom_call.1} parent=1 // pred_check
      _
    $region27: #{tpu_custom_call.1} parent=1 // pred_check_branch
      %49 = sbr.rel (0) target = $region29
    $region28: #{tpu_custom_call.1} parent=1 // pred_region
      %s51 = ssub.s32 2048, 2048
      %52 = vsyncadd [#allocation6], %s51
      %s53 = sshll.u32 [#allocation7], 4
      %s54 = int_to_ptr.vmem [resolvable:$true] %s53
      %59 = dma.hbm_to_vmem [thread:$0]  %s6, 2048, %s54, [#allocation6], 128, 128, 8
    $region29: #{tpu_custom_call.1} parent=1 // pred_fallthru
      _
    // Predicated region
    $region30: #{tpu_custom_call.1} parent=1 // pred_check
      _
    $region31: #{tpu_custom_call.1} parent=1 // pred_check_branch
      %61 = sbr.rel (0) target = $region33
    $region32: #{tpu_custom_call.1} parent=1 // pred_region
      _
    $region33: #{tpu_custom_call.1} parent=1 // pred_fallthru
      _
    // Predicated region
    $region34: #{tpu_custom_call.1} parent=1 // pred_check
      _
    $region35: #{tpu_custom_call.1} parent=1 // pred_check_branch
      %63 = sbr.rel (0) target = $region37
    $region36: #{tpu_custom_call.1} parent=1 // pred_region
      %64 = dma.done [#allocation3], 256
    $region37: #{tpu_custom_call.1} parent=1 // pred_fallthru
      _
    // Predicated region
    $region38: #{tpu_custom_call.1} parent=1 // pred_check
      _
    $region39: #{tpu_custom_call.1} parent=1 // pred_check_branch
      %66 = sbr.rel (0) target = $region41
    $region40: #{tpu_custom_call.1} parent=1 // pred_region
      %67 = dma.done [#allocation6], 2048
    $region41: #{tpu_custom_call.1} parent=1 // pred_fallthru
      _
    // Predicated region
    $region42: #{tpu_custom_call.1} parent=1 // pred_check
      _
    $region43: #{tpu_custom_call.1} parent=1 // pred_check_branch
      %69 = sbr.rel (0) target = $region45
    $region44: #{tpu_custom_call.1} parent=1 // pred_region
      %70 = dma.done [#allocation6], 2048
    $region45: #{tpu_custom_call.1} parent=1 // pred_fallthru
      _
    %v71 = vld [vmem:[#allocation2] sm:$0xff]
    %v72 = vld [vmem:[#allocation2 + $0x8] sm:$0xff]
    %73 = vadd.xlane.f32.xlu0 %v71
    %v74 = vpop.xlane.xlu0 %73
    %75 = vadd.xlane.f32.xlu0 %v72
    %v76 = vpop.xlane.xlu0 %75
    %v77 = vmul.f32 %v74, 0.03125
    %v78 = vmul.f32 %v76, 0.03125
    %v79 = vsub.f32 %v71, %v77
    %v80 = vsub.f32 %v72, %v78
    %v81 = vld [vmem:[%s1] sm:$0x1]
    %v83 = vlaneseq
    %v84 = vshrl.u32 %v83, 7
    %v85 = vsub.s32 0, %v84
    %v86 = vrot.slane %v81, %v85
    %v88 = vmul.f32 %v79, %v86
    %v89 = vmul.f32 %v80, %v86
    %v90 = vmul.f32 %v88, %v88
    %v91 = vmul.f32 %v89, %v89
    %92 = vadd.xlane.f32.xlu0 %v90
    %v93 = vpop.xlane.xlu0 %92
    %94 = vadd.xlane.f32.xlu0 %v91
    %v95 = vpop.xlane.xlu0 %94
    %v96 = vmul.f32 %v93, 0.03125
    %v97 = vmul.f32 %v95, 0.03125
    %v98 = vadd.f32 %v96, 1e-06
    %v99 = vadd.f32 %v97, 1e-06
    %v100 = vrsqrt.pop %v98
    %v101 = vrsqrt.pop %v99
    %v102 = vmul.f32 %v88, %v100
    %v103 = vmul.f32 %v89, %v101
    %v104 = vld [vmem:[%s2] sm:$0x1]
    %v106 = vlaneseq
    %v107 = vshrl.u32 %v106, 7
    %v108 = vsub.s32 0, %v107
    %v109 = vrot.slane %v104, %v108
    %v111 = vmul.f32 %v102, %v109
    %v112 = vmul.f32 %v103, %v109
    %v113 = vld [vmem:[%s3] sm:$0x1]
    %v115 = vlaneseq
    %v116 = vshrl.u32 %v115, 7
    %v117 = vsub.s32 0, %v116
    %v118 = vrot.slane %v113, %v117
    %v120 = vadd.f32 %v111, %v118
    %v121 = vadd.f32 %v112, %v118
    %v122 = vld [vmem:[#allocation5] sm:$0xff]
    %v123 = vld [vmem:[#allocation5 + $0x8] sm:$0xff]
    %v124 = vld [vmem:[#allocation5 + $0x10] sm:$0xff]
    %v125 = vld [vmem:[#allocation5 + $0x18] sm:$0xff]
    %v126 = vld [vmem:[#allocation5 + $0x20] sm:$0xff]
    %v127 = vld [vmem:[#allocation5 + $0x28] sm:$0xff]
    %v128 = vld [vmem:[#allocation5 + $0x30] sm:$0xff]
    %v129 = vld [vmem:[#allocation5 + $0x38] sm:$0xff]
    %v130 = vld [vmem:[#allocation5 + $0x40] sm:$0xff]
    %v131 = vld [vmem:[#allocation5 + $0x48] sm:$0xff]
    %v132 = vld [vmem:[#allocation5 + $0x50] sm:$0xff]
    %v133 = vld [vmem:[#allocation5 + $0x58] sm:$0xff]
    %v134 = vld [vmem:[#allocation5 + $0x60] sm:$0xff]
    %v135 = vld [vmem:[#allocation5 + $0x68] sm:$0xff]
    %v136 = vld [vmem:[#allocation5 + $0x70] sm:$0xff]
    %v137 = vld [vmem:[#allocation5 + $0x78] sm:$0xff]
    %v138 = vld [vmem:[%s5] sm:$0x1]
    %v140 = vlaneseq
    %v141 = vshrl.u32 %v140, 7
    %v142 = vsub.s32 0, %v141
    %v143 = vrot.slane %v138, %v142
    %145 = vmatprep.subr.mxu0 0.0
    %146 = vmatpush1.msra.mxu0 %v122
    %147 = vmatprep.subr.mxu0 0.0
    %148 = vmatpush1.msra.mxu0 %v123
    %149 = vmatprep.subr.mxu0 0.0
    %150 = vmatpush1.msra.mxu0 %v124
    %151 = vmatprep.subr.mxu0 0.0
    %152 = vmatpush1.msra.mxu0 %v125
    %153 = vmatprep.subr.mxu0 0.0
    %154 = vmatpush1.msra.mxu0 %v126
    %155 = vmatprep.subr.mxu0 0.0
    %156 = vmatpush1.msra.mxu0 %v127
    %157 = vmatprep.subr.mxu0 0.0
    %158 = vmatpush1.msra.mxu0 %v128
    %159 = vmatprep.subr.mxu0 0.0
    %160 = vmatpush1.msra.mxu0 %v129
    %161 = vmatprep.subr.mxu0 0.0
    %162 = vmatpush1.msra.mxu0 %v130
    %163 = vmatprep.subr.mxu0 0.0
    %164 = vmatpush1.msra.mxu0 %v131
    %165 = vmatprep.subr.mxu0 0.0
    %166 = vmatpush1.msra.mxu0 %v132
    %167 = vmatprep.subr.mxu0 0.0
    %168 = vmatpush1.msra.mxu0 %v133
    %169 = vmatprep.subr.mxu0 0.0
    %170 = vmatpush1.msra.mxu0 %v134
    %171 = vmatprep.subr.mxu0 0.0
    %172 = vmatpush1.msra.mxu0 %v135
    %173 = vmatprep.subr.mxu0 0.0
    %174 = vmatpush1.msra.mxu0 %v136
    %175 = vmatprep.subr.mxu0 0.0
    %176 = vmatpush1.msra.mxu0 %v137
    %177 = vmatprep.subr.mxu0 0.0
    %178 = vmatpush1.msra.mxu0 0.0
    %179 = vmatprep.subr.mxu0 0.0
    %180 = vmatpush1.msra.mxu0 0.0
    %181 = vmatprep.subr.mxu0 0.0
    %182 = vmatpush1.msra.mxu0 0.0
    %183 = vmatprep.subr.mxu0 0.0
    %184 = vmatpush1.msra.mxu0 0.0
    %185 = vmatprep.subr.mxu0 0.0
    %186 = vmatpush1.msra.mxu0 0.0
    %187 = vmatprep.subr.mxu0 0.0
    %188 = vmatpush1.msra.mxu0 0.0
    %189 = vmatprep.subr.mxu0 0.0
    %190 = vmatpush1.msra.mxu0 0.0
    %191 = vmatprep.subr.mxu0 0.0
    %192 = vmatpush1.msra.mxu0 0.0
    %193 = vmatprep.subr.mxu0 0.0
    %194 = vmatpush1.msra.mxu0 0.0
    %195 = vmatprep.subr.mxu0 0.0
    %196 = vmatpush1.msra.mxu0 0.0
    %197 = vmatprep.subr.mxu0 0.0
    %198 = vmatpush1.msra.mxu0 0.0
    %199 = vmatprep.subr.mxu0 0.0
    %200 = vmatpush1.msra.mxu0 0.0
    %201 = vmatprep.subr.mxu0 0.0
    %202 = vmatpush1.msra.mxu0 0.0
    %203 = vmatprep.subr.mxu0 0.0
    %204 = vmatpush1.msra.mxu0 0.0
    %205 = vmatprep.subr.mxu0 0.0
    %206 = vmatpush1.msra.mxu0 0.0
    %207 = vmatprep.subr.mxu0 0.0
    %208 = vmatpush1.msra.mxu0 0.0
    %209 = vmatprep.mubr.f32.mxu0 0.0
    %210 = vmatmul.mubr.f32.gmra.mrb[0].mxu0 %v120
    %v211 = vpop.f32.mrb[0].mxu0
    %v212 = vadd.f32 %v143, %v211
    %v213 = vpop.f32.mrb[0].mxu0
    %214 = vmatprep.mubr.f32.mxu0 0.0
    %215 = vmatmul.mubr.f32.gmra.mrb[0].mxu0 %v121
    %v216 = vpop.f32.mrb[0].mxu0
    %v217 = vadd.f32 %v143, %v216
    %v218 = vpop.f32.mrb[0].mxu0
    %219 = vdwg.mxu0
    %v220 = vmax.f32 %v212, 0.0
    %v221 = vmax.f32 %v217, 0.0
    %v222 = vld [vmem:[#allocation7] sm:$0xff]
    %v223 = vld [vmem:[#allocation7 + $0x8] sm:$0xff]
    %v224 = vld [vmem:[#allocation7 + $0x10] sm:$0xff]
    %v225 = vld [vmem:[#allocation7 + $0x18] sm:$0xff]
    %v226 = vld [vmem:[#allocation7 + $0x20] sm:$0xff]
    %v227 = vld [vmem:[#allocation7 + $0x28] sm:$0xff]
    %v228 = vld [vmem:[#allocation7 + $0x30] sm:$0xff]
    %v229 = vld [vmem:[#allocation7 + $0x38] sm:$0xff]
    %v230 = vld [vmem:[#allocation7 + $0x40] sm:$0xff]
    %v231 = vld [vmem:[#allocation7 + $0x48] sm:$0xff]
    %v232 = vld [vmem:[#allocation7 + $0x50] sm:$0xff]
    %v233 = vld [vmem:[#allocation7 + $0x58] sm:$0xff]
    %v234 = vld [vmem:[#allocation7 + $0x60] sm:$0xff]
    %v235 = vld [vmem:[#allocation7 + $0x68] sm:$0xff]
    %v236 = vld [vmem:[#allocation7 + $0x70] sm:$0xff]
    %v237 = vld [vmem:[#allocation7 + $0x78] sm:$0xff]
    %v238 = vld [vmem:[%s7] sm:$0x1]
    %v240 = vlaneseq
    %v241 = vshrl.u32 %v240, 7
    %v242 = vsub.s32 0, %v241
    %v243 = vrot.slane %v238, %v242
    %245 = vmatprep.subr.mxu0 0.0
    %246 = vmatpush1.msra.mxu0 %v222
    %247 = vmatprep.subr.mxu0 0.0
    %248 = vmatpush1.msra.mxu0 %v223
    %249 = vmatprep.subr.mxu0 0.0
    %250 = vmatpush1.msra.mxu0 %v224
    %251 = vmatprep.subr.mxu0 0.0
    %252 = vmatpush1.msra.mxu0 %v225
    %253 = vmatprep.subr.mxu0 0.0
    %254 = vmatpush1.msra.mxu0 %v226
    %255 = vmatprep.subr.mxu0 0.0
    %256 = vmatpush1.msra.mxu0 %v227
    %257 = vmatprep.subr.mxu0 0.0
    %258 = vmatpush1.msra.mxu0 %v228
    %259 = vmatprep.subr.mxu0 0.0
    %260 = vmatpush1.msra.mxu0 %v229
    %261 = vmatprep.subr.mxu0 0.0
    %262 = vmatpush1.msra.mxu0 %v230
    %263 = vmatprep.subr.mxu0 0.0
    %264 = vmatpush1.msra.mxu0 %v231
    %265 = vmatprep.subr.mxu0 0.0
    %266 = vmatpush1.msra.mxu0 %v232
    %267 = vmatprep.subr.mxu0 0.0
    %268 = vmatpush1.msra.mxu0 %v233
    %269 = vmatprep.subr.mxu0 0.0
    %270 = vmatpush1.msra.mxu0 %v234
    %271 = vmatprep.subr.mxu0 0.0
    %272 = vmatpush1.msra.mxu0 %v235
    %273 = vmatprep.subr.mxu0 0.0
    %274 = vmatpush1.msra.mxu0 %v236
    %275 = vmatprep.subr.mxu0 0.0
    %276 = vmatpush1.msra.mxu0 %v237
    %277 = vmatprep.subr.mxu0 0.0
    %278 = vmatpush1.msra.mxu0 0.0
    %279 = vmatprep.subr.mxu0 0.0
    %280 = vmatpush1.msra.mxu0 0.0
    %281 = vmatprep.subr.mxu0 0.0
    %282 = vmatpush1.msra.mxu0 0.0
    %283 = vmatprep.subr.mxu0 0.0
    %284 = vmatpush1.msra.mxu0 0.0
    %285 = vmatprep.subr.mxu0 0.0
    %286 = vmatpush1.msra.mxu0 0.0
    %287 = vmatprep.subr.mxu0 0.0
    %288 = vmatpush1.msra.mxu0 0.0
    %289 = vmatprep.subr.mxu0 0.0
    %290 = vmatpush1.msra.mxu0 0.0
    %291 = vmatprep.subr.mxu0 0.0
    %292 = vmatpush1.msra.mxu0 0.0
    %293 = vmatprep.subr.mxu0 0.0
    %294 = vmatpush1.msra.mxu0 0.0
    %295 = vmatprep.subr.mxu0 0.0
    %296 = vmatpush1.msra.mxu0 0.0
    %297 = vmatprep.subr.mxu0 0.0
    %298 = vmatpush1.msra.mxu0 0.0
    %299 = vmatprep.subr.mxu0 0.0
    %300 = vmatpush1.msra.mxu0 0.0
    %301 = vmatprep.subr.mxu0 0.0
    %302 = vmatpush1.msra.mxu0 0.0
    %303 = vmatprep.subr.mxu0 0.0
    %304 = vmatpush1.msra.mxu0 0.0
    %305 = vmatprep.subr.mxu0 0.0
    %306 = vmatpush1.msra.mxu0 0.0
    %307 = vmatprep.subr.mxu0 0.0
    %308 = vmatpush1.msra.mxu0 0.0
    %309 = vmatprep.mubr.f32.mxu0 0.0
    %310 = vmatmul.mubr.f32.gmra.mrb[0].mxu0 %v220
    %v311 = vpop.f32.mrb[0].mxu0
    %v312 = vadd.f32 %v243, %v311
    %v313 = vpop.f32.mrb[0].mxu0
    %314 = vmatprep.mubr.f32.mxu0 0.0
    %315 = vmatmul.mubr.f32.gmra.mrb[0].mxu0 %v221
    %v316 = vpop.f32.mrb[0].mxu0
    %v317 = vadd.f32 %v243, %v316
    %v318 = vpop.f32.mrb[0].mxu0
    %319 = vdwg.mxu0
    %320 = vst [vmem:[#allocation8] sm:$0xff] %v312
    %321 = vst [vmem:[#allocation8 + $0x8] sm:$0xff] %v317
    // Predicated region
    $region46: #{tpu_custom_call.1} parent=1 // pred_check
      _
    $region47: #{tpu_custom_call.1} parent=1 // pred_check_branch
      %323 = sbr.rel (0) target = $region49
    $region48: #{tpu_custom_call.1} parent=1 // pred_region
      %s325 = ssub.s32 256, 256
      %326 = vsyncadd [#allocation4], %s325
      %s327 = sshll.u32 [#allocation8], 4
      %s328 = int_to_ptr.vmem [resolvable:$true] %s327
      %333 = dma.vmem_to_hbm [thread:$0]  %s328, 256, %s8, [#allocation4], 128, 128, 8
    $region49: #{tpu_custom_call.1} parent=1 // pred_fallthru
      _
    // Predicated region
    $region50: #{tpu_custom_call.1} parent=1 // pred_check
      _
    $region51: #{tpu_custom_call.1} parent=1 // pred_check_branch
      %335 = sbr.rel (0) target = $region53
    $region52: #{tpu_custom_call.1} parent=1 // pred_region
      %336 = dma.done [#allocation4], 256
    $region53: #{tpu_custom_call.1} parent=1 // pred_fallthru
      _
    %337 = vsyncpa [#allocation3], 1
    %338 = vsyncpa [#allocation6], 1
    %339 = vsyncpa [#allocation4], 1

</llo_original>
